<compile_context>
chip_gen: v7x
topology: tpu7x:2x2x1
jax: 0.10.0
libtpu: 0.0.40
codegen_flags: <defaults>
</compile_context>

<pallas_src>
import functools

import jax
import jax.numpy as jnp
from jax import lax
from jax.experimental import pallas as pl
from jax.experimental.pallas import tpu as pltpu


def _round_up(x, m):
    return (x + m - 1) // m * m


def _vmem_capacity_bytes():
    try:
        return int(pltpu.get_tpu_info().vmem_capacity_bytes)
    except Exception:
        return 64 * 1024 * 1024  # conservative fallback (v7x per-TC VMEM)


def _vmem_resident_spec():
    # Whole-array, single VMEM copy (no pipelining / no double-buffering).
    return pl.BlockSpec(memory_space=pltpu.MemorySpace.VMEM)


def _vmem_budget_bytes(tm, depth, dp, resident):
    """Requested VMEM budget: pipelined blocks + resident operands + fp32 temps."""
    tile = 2 * 2 * tm * dp * 4                 # x + out, double-buffered, f32
    temp = 4 * tm * dp * 4                     # h/f/g fp32 temporaries + bf16 cast
    bias = 2 * _round_up(depth, 8) * dp * 4    # bf + bg, f32, sublane-padded
    if resident:
        weights = 2 * depth * dp * dp * 2      # Wf + Wg stacks, bf16, single copy
        scratch = 0
    else:
        weights = 2 * 2 * dp * dp * 2          # one layer Wf + Wg, double-buffered
        scratch = tm * dp * 4                  # residual-stream accumulator
    return int((tile + temp + bias + weights + scratch) * 1.3) + (4 << 20)


# ----------------------------- kernel bodies --------------------------------


def _make_resident_kernel(depth, unroll_static):
    """Weights fully resident in VMEM; whole depth stack per row tile."""

    def kernel(x_ref, wf_ref, bf_ref, wg_ref, bg_ref, o_ref):
        def layer(l, h):
            f = jnp.dot(h.astype(wf_ref.dtype), wf_ref[l],
                        preferred_element_type=jnp.float32)
            f = f + bf_ref[pl.ds(l, 1), :]
            h = h + f                                     # x = x + f(x)
            g = jnp.dot(h.astype(wg_ref.dtype), wg_ref[l],
                        preferred_element_type=jnp.float32)
            g = g + bg_ref[pl.ds(l, 1), :]
            return h + g                                  # x = x + g(x)

        h = x_ref[...].astype(jnp.float32)                # residual stream in fp32
        if unroll_static:
            for l in range(depth):                        # small depth: unroll
                h = layer(l, h)
        else:
            h = lax.fori_loop(0, depth, layer, h)         # bounded live ranges
        o_ref[...] = h.astype(o_ref.dtype)

    return kernel


def _stream_kernel(x_ref, wf_ref, bf_ref, wg_ref, bg_ref, o_ref, h_ref):
    """Depth as inner grid axis; per-layer weights streamed, h in VMEM scratch."""
    l = pl.program_id(1)

    @pl.when(l == 0)
    def _():
        h_ref[...] = x_ref[...].astype(jnp.float32)

    h = h_ref[...]
    f = jnp.dot(h.astype(wf_ref.dtype), wf_ref[0],
                preferred_element_type=jnp.float32) + bf_ref[pl.ds(l, 1), :]
    h = h + f
    g = jnp.dot(h.astype(wg_ref.dtype), wg_ref[0],
                preferred_element_type=jnp.float32) + bg_ref[pl.ds(l, 1), :]
    h = h + g
    h_ref[...] = h

    @pl.when(l == pl.num_programs(1) - 1)
    def _():
        o_ref[...] = h.astype(o_ref.dtype)


# ------------------------------- wrapper -------------------------------------


def sequential_sequence_forward(x, wf, bf, wg, bg, *, block_rows=None, force_mode=None):
    """x: [B, N, D] f32; wf/wg: [depth, D, D]; bf/bg: [depth, D]. Returns [B, N, D].

    force_mode: None (auto), "resident" (weights fully VMEM-resident; v5e/v6e
    default) or "stream" (depth-inner grid with per-layer weight streaming; the
    v7x / large depth*D^2 path).
    """
    B, N, D = x.shape
    depth = wf.shape[0]
    M = B * N

    vmem_cap = _vmem_capacity_bytes()
    vmem_budget_cap = int(0.85 * vmem_cap)         # headroom for Mosaic scratch

    # ---- pad to TPU-friendly tiles (zeros -> exact after slicing back) ----
    Dp = _round_up(D, 128)                         # lane-dense last dim
    if block_rows is None:
        block_rows = 512 if vmem_cap >= (100 << 20) else 256
    TM = min(block_rows, _round_up(M, 16))         # row tile, multiple of 16

    if force_mode == "resident":
        use_stream = False
    elif force_mode == "stream":
        use_stream = True
    else:
        use_stream = _vmem_budget_bytes(TM, depth, Dp, resident=True) > vmem_budget_cap

    # Shrink the row tile if even the selected mode would overflow the budget.
    while TM > 16 and _vmem_budget_bytes(TM, depth, Dp, not use_stream) > vmem_budget_cap:
        TM = max(16, (TM // 2) // 16 * 16)

    Mp = _round_up(M, TM)

    x2 = x.reshape(M, D).astype(jnp.float32)
    if (Mp, Dp) != (M, D):
        x2 = jnp.pad(x2, ((0, Mp - M), (0, Dp - D)))

    def pad_w(w):   # -> [depth, Dp, Dp] bf16 (MXU peak, half HBM/VMEM traffic)
        return jnp.pad(w, ((0, 0), (0, Dp - D), (0, Dp - D))).astype(jnp.bfloat16)

    def pad_b(b):   # -> [depth, Dp] f32
        return jnp.pad(b, ((0, 0), (0, Dp - D))).astype(jnp.float32)

    wf_p, wg_p = pad_w(wf), pad_w(wg)
    bf_p, bg_p = pad_b(bf), pad_b(bg)

    vmem_limit = min(max(_vmem_budget_bytes(TM, depth, Dp, not use_stream), 16 << 20),
                     vmem_budget_cap)
    flops = 4 * Mp * Dp * Dp * depth               # 2 matmuls/layer, 2*M*D*D each

    if not use_stream:
        # -------- resident-weight path (v5e/v6e, or small depth*D^2) --------
        cost = pl.CostEstimate(
            flops=flops, transcendentals=0,
            bytes_accessed=(2 * Mp * Dp * 4              # x in + out
                            + 2 * depth * Dp * Dp * 2    # weights, loaded once
                            + 2 * depth * Dp * 4))       # biases
        out = pl.pallas_call(
            _make_resident_kernel(depth, unroll_static=depth <= 4),
            out_shape=jax.ShapeDtypeStruct((Mp, Dp), x.dtype),
            grid=(Mp // TM,),
            in_specs=[
                pl.BlockSpec((TM, Dp), lambda i: (i, 0)),   # x row tile (pipelined)
                _vmem_resident_spec(),                      # Wf stack (one VMEM copy)
                _vmem_resident_spec(),                      # bf stack
                _vmem_resident_spec(),                      # Wg stack
                _vmem_resident_spec(),                      # bg stack
            ],
            out_specs=pl.BlockSpec((TM, Dp), lambda i: (i, 0)),
            compiler_params=pltpu.CompilerParams(
                dimension_semantics=("parallel",),          # rows shard across TCs
                vmem_limit_bytes=vmem_limit),
            cost_estimate=cost,
        )(x2, wf_p, bf_p, wg_p, bg_p)
    else:
        # -------- depth-streaming path (v7x / large depth*D^2) --------
        cost = pl.CostEstimate(
            flops=flops, transcendentals=0,
            bytes_accessed=((depth + 1) * Mp * Dp * 4               # x + out
                            + (Mp // TM) * 2 * depth * Dp * Dp * 2  # streamed weights
                            + 2 * depth * Dp * 4))                  # biases
        out = pl.pallas_call(
            _stream_kernel,
            out_shape=jax.ShapeDtypeStruct((Mp, Dp), x.dtype),
            grid=(Mp // TM, depth),
            in_specs=[
                pl.BlockSpec((TM, Dp), lambda i, l: (i, 0)),        # x row tile
                pl.BlockSpec((1, Dp, Dp), lambda i, l: (l, 0, 0)),  # Wf_l (streamed)
                _vmem_resident_spec(),                              # bf (resident)
                pl.BlockSpec((1, Dp, Dp), lambda i, l: (l, 0, 0)),  # Wg_l (streamed)
                _vmem_resident_spec(),                              # bg (resident)
            ],
            out_specs=pl.BlockSpec((TM, Dp), lambda i, l: (i, 0)),
            scratch_shapes=[pltpu.VMEM((TM, Dp), jnp.float32)],     # residual stream h
            compiler_params=pltpu.CompilerParams(
                dimension_semantics=("parallel", "arbitrary"),
                vmem_limit_bytes=vmem_limit),
            cost_estimate=cost,
        )(x2, wf_p, bf_p, wg_p, bg_p)

    return out[:M, :D].reshape(B, N, D)


def sequential_sequence_reference(x, wf, bf, wg, bg):
    """Pure-JAX reference with the same bf16-matmul / fp32-residual numerics."""
    B, N, D = x.shape
    h = x.reshape(B * N, D).astype(jnp.float32)
    for l in range(wf.shape[0]):
        f = jnp.dot(h.astype(jnp.bfloat16), wf[l].astype(jnp.bfloat16),
                    preferred_element_type=jnp.float32) + bf[l]
        h = h + f
        g = jnp.dot(h.astype(jnp.bfloat16), wg[l].astype(jnp.bfloat16),
                    preferred_element_type=jnp.float32) + bg[l]
        h = h + g
    return h.reshape(B, N, D).astype(x.dtype)


if __name__ == "__main__":
    key = jax.random.PRNGKey(0)
    kx, kwf, kwg, kbf, kbg = jax.random.split(key, 5)

    B, N, D, depth = 2, 8, 32, 2
    x = jax.random.normal(kx, (B, N, D), dtype=jnp.float32)

    scale = 1.0 / jnp.sqrt(jnp.float32(D))
    wf = jax.random.normal(kwf, (depth, D, D), dtype=jnp.float32) * scale
    wg = jax.random.normal(kwg, (depth, D, D), dtype=jnp.float32) * scale
    bf = jax.random.normal(kbf, (depth, D), dtype=jnp.float32) * 0.01
    bg = jax.random.normal(kbg, (depth, D), dtype=jnp.float32) * 0.01

    ref = sequential_sequence_reference(x, wf, bf, wg, bg)

    # 1) Default (resident-weights) path.
    out = sequential_sequence_forward(x, wf, bf, wg, bg)
    jax.block_until_ready(out)
    assert out.shape == (B, N, D)
    assert jnp.allclose(out, ref, atol=1e-2, rtol=1e-2), (
        f"resident path: max abs err = {jnp.max(jnp.abs(out - ref))}")

    # 2) Depth-streaming path (v7x fallback for large depth*D^2) for coverage.
    out_s = sequential_sequence_forward(x, wf, bf, wg, bg, force_mode="stream")
    jax.block_until_ready(out_s)
    assert jnp.allclose(out_s, ref, atol=1e-2, rtol=1e-2), (
        f"stream path: max abs err = {jnp.max(jnp.abs(out_s - ref))}")

    # 3) Deeper stack -> exercises the in-kernel lax.fori_loop over layers.
    depth2 = 6
    kf2, kg2, kbf2, kbg2 = jax.random.split(jax.random.PRNGKey(1), 4)
    wf2 = jax.random.normal(kf2, (depth2, D, D), dtype=jnp.float32) * scale
    wg2 = jax.random.normal(kg2, (depth2, D, D), dtype=jnp.float32) * scale
    bf2 = jax.random.normal(kbf2, (depth2, D), dtype=jnp.float32) * 0.01
    bg2 = jax.random.normal(kbg2, (depth2, D), dtype=jnp.float32) * 0.01
    out2 = sequential_sequence_forward(x, wf2, bf2, wg2, bg2)
    jax.block_until_ready(out2)
    ref2 = sequential_sequence_reference(x, wf2, bf2, wg2, bg2)
    assert jnp.allclose(out2, ref2, atol=1e-2, rtol=1e-2), (
        f"fori path: max abs err = {jnp.max(jnp.abs(out2 - ref2))}")

    print("KERNEL_OK")
</pallas_src>

<mosaic_0001>
module attributes {stable_mosaic.version = 11 : i64} {
  func.func @kernel(%arg0: i32, %arg1: memref<16x128xf32, #tpu.memory_space<vmem>>, %arg2: memref<2x128x128xbf16, #tpu.memory_space<vmem>>, %arg3: memref<2x128xf32, #tpu.memory_space<vmem>>, %arg4: memref<2x128x128xbf16, #tpu.memory_space<vmem>>, %arg5: memref<2x128xf32, #tpu.memory_space<vmem>>, %arg6: memref<16x128xf32, #tpu.memory_space<vmem>>) attributes {dimension_semantics = [#tpu.dimension_semantics<parallel>], iteration_bounds = array<i64: 1>, scalar_prefetch = 0 : i64, scratch_operands = 0 : i64, tpu.core_type = #tpu.core_type<tc>, window_params = [{transform_indices = @transform_0, window_bounds = array<i64: 16, 128>}, {pipeline_mode = #tpu.pipeline_mode<synchronous>, transform_indices = @transform_1, window_bounds = array<i64: 2, 128, 128>}, {pipeline_mode = #tpu.pipeline_mode<synchronous>, transform_indices = @transform_2, window_bounds = array<i64: 2, 128>}, {pipeline_mode = #tpu.pipeline_mode<synchronous>, transform_indices = @transform_3, window_bounds = array<i64: 2, 128, 128>}, {pipeline_mode = #tpu.pipeline_mode<synchronous>, transform_indices = @transform_4, window_bounds = array<i64: 2, 128>}, {transform_indices = @transform_5, window_bounds = array<i64: 16, 128>}]} {
    %c0 = arith.constant 0 : index
    %c0_0 = arith.constant 0 : index
    %0 = vector.load %arg1[%c0, %c0_0] : memref<16x128xf32, #tpu.memory_space<vmem>>, vector<16x128xf32>
    %1 = arith.truncf %0 : vector<16x128xf32> to vector<16x128xbf16>
    %c0_1 = arith.constant 0 : index
    %c0_2 = arith.constant 0 : index
    %c0_3 = arith.constant 0 : index
    %2 = vector.load %arg2[%c0_1, %c0_2, %c0_3] : memref<2x128x128xbf16, #tpu.memory_space<vmem>>, vector<1x128x128xbf16>
    %3 = vector.shape_cast %2 : vector<1x128x128xbf16> to vector<128x128xbf16>
    %cst = arith.constant dense<0.000000e+00> : vector<16x128xf32>
    %4 = tpu.matmul %1, %3, %cst {dimension_numbers = #tpu.dot_dimension_numbers<[1], [0], [0], [1], [0, 0, 1, 1], [], []>} : vector<16x128xbf16>, vector<128x128xbf16>, vector<16x128xf32> -> vector<16x128xf32>
    %c0_4 = arith.constant 0 : index
    %c0_5 = arith.constant 0 : index
    %5 = vector.load %arg3[%c0_4, %c0_5] : memref<2x128xf32, #tpu.memory_space<vmem>>, vector<1x128xf32>
    %6 = vector.broadcast %5 : vector<1x128xf32> to vector<16x128xf32>
    %7 = arith.addf %4, %6 : vector<16x128xf32>
    %8 = arith.addf %0, %7 : vector<16x128xf32>
    %9 = arith.truncf %8 : vector<16x128xf32> to vector<16x128xbf16>
    %c0_6 = arith.constant 0 : index
    %c0_7 = arith.constant 0 : index
    %c0_8 = arith.constant 0 : index
    %10 = vector.load %arg4[%c0_6, %c0_7, %c0_8] : memref<2x128x128xbf16, #tpu.memory_space<vmem>>, vector<1x128x128xbf16>
    %11 = vector.shape_cast %10 : vector<1x128x128xbf16> to vector<128x128xbf16>
    %cst_9 = arith.constant dense<0.000000e+00> : vector<16x128xf32>
    %12 = tpu.matmul %9, %11, %cst_9 {dimension_numbers = #tpu.dot_dimension_numbers<[1], [0], [0], [1], [0, 0, 1, 1], [], []>} : vector<16x128xbf16>, vector<128x128xbf16>, vector<16x128xf32> -> vector<16x128xf32>
    %c0_10 = arith.constant 0 : index
    %c0_11 = arith.constant 0 : index
    %13 = vector.load %arg5[%c0_10, %c0_11] : memref<2x128xf32, #tpu.memory_space<vmem>>, vector<1x128xf32>
    %14 = vector.broadcast %13 : vector<1x128xf32> to vector<16x128xf32>
    %15 = arith.addf %12, %14 : vector<16x128xf32>
    %16 = arith.addf %8, %15 : vector<16x128xf32>
    %17 = arith.truncf %16 : vector<16x128xf32> to vector<16x128xbf16>
    %c1 = arith.constant 1 : index
    %c0_12 = arith.constant 0 : index
    %c0_13 = arith.constant 0 : index
    %18 = vector.load %arg2[%c1, %c0_12, %c0_13] : memref<2x128x128xbf16, #tpu.memory_space<vmem>>, vector<1x128x128xbf16>
    %19 = vector.shape_cast %18 : vector<1x128x128xbf16> to vector<128x128xbf16>
    %cst_14 = arith.constant dense<0.000000e+00> : vector<16x128xf32>
    %20 = tpu.matmul %17, %19, %cst_14 {dimension_numbers = #tpu.dot_dimension_numbers<[1], [0], [0], [1], [0, 0, 1, 1], [], []>} : vector<16x128xbf16>, vector<128x128xbf16>, vector<16x128xf32> -> vector<16x128xf32>
    %c1_15 = arith.constant 1 : index
    %c0_16 = arith.constant 0 : index
    %21 = vector.load %arg3[%c1_15, %c0_16] : memref<2x128xf32, #tpu.memory_space<vmem>>, vector<1x128xf32>
    %22 = vector.broadcast %21 : vector<1x128xf32> to vector<16x128xf32>
    %23 = arith.addf %20, %22 : vector<16x128xf32>
    %24 = arith.addf %16, %23 : vector<16x128xf32>
    %25 = arith.truncf %24 : vector<16x128xf32> to vector<16x128xbf16>
    %c1_17 = arith.constant 1 : index
    %c0_18 = arith.constant 0 : index
    %c0_19 = arith.constant 0 : index
    %26 = vector.load %arg4[%c1_17, %c0_18, %c0_19] : memref<2x128x128xbf16, #tpu.memory_space<vmem>>, vector<1x128x128xbf16>
    %27 = vector.shape_cast %26 : vector<1x128x128xbf16> to vector<128x128xbf16>
    %cst_20 = arith.constant dense<0.000000e+00> : vector<16x128xf32>
    %28 = tpu.matmul %25, %27, %cst_20 {dimension_numbers = #tpu.dot_dimension_numbers<[1], [0], [0], [1], [0, 0, 1, 1], [], []>} : vector<16x128xbf16>, vector<128x128xbf16>, vector<16x128xf32> -> vector<16x128xf32>
    %c1_21 = arith.constant 1 : index
    %c0_22 = arith.constant 0 : index
    %29 = vector.load %arg5[%c1_21, %c0_22] : memref<2x128xf32, #tpu.memory_space<vmem>>, vector<1x128xf32>
    %30 = vector.broadcast %29 : vector<1x128xf32> to vector<16x128xf32>
    %31 = arith.addf %28, %30 : vector<16x128xf32>
    %32 = arith.addf %24, %31 : vector<16x128xf32>
    %c0_23 = arith.constant 0 : index
    %c0_24 = arith.constant 0 : index
    %33 = vector.load %arg6[%c0_23, %c0_24] : memref<16x128xf32, #tpu.memory_space<vmem>>, vector<16x128xf32>
    tpu.vector_store %arg6[%c0_23, %c0_24], %32 {strides = array<i32>} : memref<16x128xf32, #tpu.memory_space<vmem>>, vector<16x128xf32>,
    return
  }
  func.func @transform_0(%arg0: i32) -> (i32, i32) {
    %c0_i32 = arith.constant 0 : i32
    %c0_i32_0 = arith.constant 0 : i32
    return %arg0, %c0_i32 : i32, i32
  }
  func.func @transform_1(%arg0: i32) -> (i32, i32, i32) {
    %c0_i32 = arith.constant 0 : i32
    %c0_i32_0 = arith.constant 0 : i32
    %c0_i32_1 = arith.constant 0 : i32
    %c0_i32_2 = arith.constant 0 : i32
    return %c0_i32, %c0_i32_0, %c0_i32_1 : i32, i32, i32
  }
  func.func @transform_2(%arg0: i32) -> (i32, i32) {
    %c0_i32 = arith.constant 0 : i32
    %c0_i32_0 = arith.constant 0 : i32
    %c0_i32_1 = arith.constant 0 : i32
    return %c0_i32, %c0_i32_0 : i32, i32
  }
  func.func @transform_3(%arg0: i32) -> (i32, i32, i32) {
    %c0_i32 = arith.constant 0 : i32
    %c0_i32_0 = arith.constant 0 : i32
    %c0_i32_1 = arith.constant 0 : i32
    %c0_i32_2 = arith.constant 0 : i32
    return %c0_i32, %c0_i32_0, %c0_i32_1 : i32, i32, i32
  }
  func.func @transform_4(%arg0: i32) -> (i32, i32) {
    %c0_i32 = arith.constant 0 : i32
    %c0_i32_0 = arith.constant 0 : i32
    %c0_i32_1 = arith.constant 0 : i32
    return %c0_i32, %c0_i32_0 : i32, i32
  }
  func.func @transform_5(%arg0: i32) -> (i32, i32) {
    %c0_i32 = arith.constant 0 : i32
    %c0_i32_0 = arith.constant 0 : i32
    return %arg0, %c0_i32 : i32, i32
  }
}

</mosaic_0001>

<llo_original>
// kernel: tpu_custom_call.1
$region0: #{tpu_custom_call.1}
  #allocation0 [shape = 'u32[]', space=smem, size = 0x4, offset = 0x4, fixed_abs, tag = 'smem constant byte address 0x4 - core index']
  #allocation1 [shape = 'u32[144,128]{1,0:T(1,128)}', space=vmem, size = 0x12000, scoped, tag = 'internal scratch']
  %s0 = inlined_call_operand.hbm [shape: f32[16,128], index: 0, kind: input, shape index: {}]
  %s1 = inlined_call_operand.hbm [shape: bf16[2,128,128], index: 1, kind: input, shape index: {}]
  %s2 = inlined_call_operand.vmem [shape: f32[2,128], index: 2, kind: input, shape index: {}]
  %s3 = inlined_call_operand.hbm [shape: bf16[2,128,128], index: 3, kind: input, shape index: {}]
  %s4 = inlined_call_operand.vmem [shape: f32[2,128], index: 4, kind: input, shape index: {}]
  %s5 = inlined_call_operand.hbm [shape: f32[16,128], index: 5, kind: output, shape index: {}]
  %s6 = sld [smem:[#allocation0]]
  $region42: #{tpu_custom_call.1} parent=0
    _
  %s8 = ssub.s32 1, %s6
  %s9 = scalar_select 0, %s8, %s6
  $region1: #{tpu_custom_call.1} parent=0
    #allocation2 [shape = 'u8[8192]{0}', space=vmem, size = 0x2000, scoped, tag = 'input window, operand 0, single buffered']
    #allocation3 [shape = 's32[1]{0}', space=sflag, size = 0x4, scoped, tag = 'scoped memory for tpu_custom_call.1']
    #allocation4 [shape = 's32[1]{0}', space=sflag, size = 0x4, scoped, tag = 'scoped memory for tpu_custom_call.1']
    #allocation5 [shape = 'u8[65536]{0}', space=vmem, size = 0x10000, scoped, tag = 'input window, operand 1, single buffered']
    #allocation6 [shape = 's32[1]{0}', space=sflag, size = 0x4, scoped, tag = 'scoped memory for tpu_custom_call.1']
    #allocation7 [shape = 'u8[65536]{0}', space=vmem, size = 0x10000, scoped, tag = 'input window, operand 3, single buffered']
    #allocation8 [shape = 'u8[8192]{0}', space=vmem, size = 0x2000, scoped, tag = 'output window, operand 0, single buffered']
    %10 = vsyncpa [#allocation3], 0
    %11 = vsyncpa [#allocation6], 0
    %12 = vsyncpa [#allocation4], 0
    // Predicated region
    $region2: #{tpu_custom_call.1} parent=1 // pred_check
      _
    $region3: #{tpu_custom_call.1} parent=1 // pred_check_branch
      %14 = sbr.rel (0) target = $region5
    $region4: #{tpu_custom_call.1} parent=1 // pred_region
      %s16 = ssub.s32 256, 256
      %17 = vsyncadd [#allocation3], %s16
      %s18 = sshll.u32 [#allocation2], 4
      %s19 = int_to_ptr.vmem [resolvable:$true] %s18
      %24 = dma.hbm_to_vmem [thread:$0]  %s0, 256, %s19, [#allocation3], 128, 128, 8
    $region5: #{tpu_custom_call.1} parent=1 // pred_fallthru
      _
    // Predicated region
    $region6: #{tpu_custom_call.1} parent=1 // pred_check
      _
    $region7: #{tpu_custom_call.1} parent=1 // pred_check_branch
      %26 = sbr.rel (0) target = $region9
    $region8: #{tpu_custom_call.1} parent=1 // pred_region
      %s28 = ssub.s32 2048, 2048
      %29 = vsyncadd [#allocation6], %s28
      %s30 = sshll.u32 [#allocation5], 4
      %s31 = int_to_ptr.vmem [resolvable:$true] %s30
      %36 = dma.hbm_to_vmem [thread:$0]  %s1, 2048, %s31, [#allocation6], 64, 64, 4
    $region9: #{tpu_custom_call.1} parent=1 // pred_fallthru
      _
    // Predicated region
    $region10: #{tpu_custom_call.1} parent=1 // pred_check
      _
    $region11: #{tpu_custom_call.1} parent=1 // pred_check_branch
      %38 = sbr.rel (0) target = $region13
    $region12: #{tpu_custom_call.1} parent=1 // pred_region
      _
    $region13: #{tpu_custom_call.1} parent=1 // pred_fallthru
      _
    // Predicated region
    $region14: #{tpu_custom_call.1} parent=1 // pred_check
      _
    $region15: #{tpu_custom_call.1} parent=1 // pred_check_branch
      %40 = sbr.rel (0) target = $region17
    $region16: #{tpu_custom_call.1} parent=1 // pred_region
      %s42 = ssub.s32 2048, 2048
      %43 = vsyncadd [#allocation6], %s42
      %s44 = sshll.u32 [#allocation7], 4
      %s45 = int_to_ptr.vmem [resolvable:$true] %s44
      %50 = dma.hbm_to_vmem [thread:$0]  %s3, 2048, %s45, [#allocation6], 64, 64, 4
    $region17: #{tpu_custom_call.1} parent=1 // pred_fallthru
      _
    // Predicated region
    $region18: #{tpu_custom_call.1} parent=1 // pred_check
      _
    $region19: #{tpu_custom_call.1} parent=1 // pred_check_branch
      %52 = sbr.rel (0) target = $region21
    $region20: #{tpu_custom_call.1} parent=1 // pred_region
      _
    $region21: #{tpu_custom_call.1} parent=1 // pred_fallthru
      _
    // Predicated region
    $region22: #{tpu_custom_call.1} parent=1 // pred_check
      _
    $region23: #{tpu_custom_call.1} parent=1 // pred_check_branch
      %54 = sbr.rel (0) target = $region25
    $region24: #{tpu_custom_call.1} parent=1 // pred_region
      %55 = dma.done [#allocation3], 256
    $region25: #{tpu_custom_call.1} parent=1 // pred_fallthru
      _
    // Predicated region
    $region26: #{tpu_custom_call.1} parent=1 // pred_check
      _
    $region27: #{tpu_custom_call.1} parent=1 // pred_check_branch
      %57 = sbr.rel (0) target = $region29
    $region28: #{tpu_custom_call.1} parent=1 // pred_region
      %58 = dma.done [#allocation6], 2048
    $region29: #{tpu_custom_call.1} parent=1 // pred_fallthru
      _
    // Predicated region
    $region30: #{tpu_custom_call.1} parent=1 // pred_check
      _
    $region31: #{tpu_custom_call.1} parent=1 // pred_check_branch
      %60 = sbr.rel (0) target = $region33
    $region32: #{tpu_custom_call.1} parent=1 // pred_region
      %61 = dma.done [#allocation6], 2048
    $region33: #{tpu_custom_call.1} parent=1 // pred_fallthru
      _
    %v63 = vld [vmem:[#allocation2] sm:$0xff]
    %v64 = vld [vmem:[#allocation2 + $0x8] sm:$0xff]
    %v65 = vpack.c.bf16 %v64, %v63
    %v66 = vld [vmem:[#allocation5] sm:$0xf]
    %v67 = vld [vmem:[#allocation5 + $0x4] sm:$0xf]
    %v68 = vld [vmem:[#allocation5 + $0x8] sm:$0xf]
    %v69 = vld [vmem:[#allocation5 + $0xc] sm:$0xf]
    %v70 = vld [vmem:[#allocation5 + $0x10] sm:$0xf]
    %v71 = vld [vmem:[#allocation5 + $0x14] sm:$0xf]
    %v72 = vld [vmem:[#allocation5 + $0x18] sm:$0xf]
    %v73 = vld [vmem:[#allocation5 + $0x1c] sm:$0xf]
    %v74 = vld [vmem:[#allocation5 + $0x20] sm:$0xf]
    %v75 = vld [vmem:[#allocation5 + $0x24] sm:$0xf]
    %v76 = vld [vmem:[#allocation5 + $0x28] sm:$0xf]
    %v77 = vld [vmem:[#allocation5 + $0x2c] sm:$0xf]
    %v78 = vld [vmem:[#allocation5 + $0x30] sm:$0xf]
    %v79 = vld [vmem:[#allocation5 + $0x34] sm:$0xf]
    %v80 = vld [vmem:[#allocation5 + $0x38] sm:$0xf]
    %v81 = vld [vmem:[#allocation5 + $0x3c] sm:$0xf]
    %v82 = vld [vmem:[%s2] sm:$0x1]
    %v83 = vlaneseq
    %v84 = vshrl.u32 %v83, 7
    %v85 = vsub.s32 0, %v84
    %v86 = vrot.slane %v82, %v85
    %v103 = vunpack.c.l.b16 %v66
    %v104 = vunpack.c.l.b16 %v67
    %v105 = vunpack.c.l.b16 %v68
    %v106 = vunpack.c.l.b16 %v69
    %v107 = vunpack.c.l.b16 %v70
    %v108 = vunpack.c.l.b16 %v71
    %v109 = vunpack.c.l.b16 %v72
    %v110 = vunpack.c.l.b16 %v73
    %v111 = vunpack.c.l.b16 %v74
    %v112 = vunpack.c.l.b16 %v75
    %v113 = vunpack.c.l.b16 %v76
    %v114 = vunpack.c.l.b16 %v77
    %v115 = vunpack.c.l.b16 %v78
    %v116 = vunpack.c.l.b16 %v79
    %v117 = vunpack.c.l.b16 %v80
    %v118 = vunpack.c.l.b16 %v81
    %v119 = vpack.c.b16 %v104, %v103
    %v120 = vpack.c.b16 %v106, %v105
    %v121 = vpack.c.b16 %v108, %v107
    %v122 = vpack.c.b16 %v110, %v109
    %v123 = vpack.c.b16 %v112, %v111
    %v124 = vpack.c.b16 %v114, %v113
    %v125 = vpack.c.b16 %v116, %v115
    %v126 = vpack.c.b16 %v118, %v117
    %135 = vmatprep.subr.bf16.mxu0 0
    %136 = vmatpush1.bf16.msra.mxu0 %v119
    %137 = vmatprep.subr.bf16.mxu0 0
    %138 = vmatpush1.bf16.msra.mxu0 %v120
    %139 = vmatprep.subr.bf16.mxu0 0
    %140 = vmatpush1.bf16.msra.mxu0 %v121
    %141 = vmatprep.subr.bf16.mxu0 0
    %142 = vmatpush1.bf16.msra.mxu0 %v122
    %143 = vmatprep.subr.bf16.mxu0 0
    %144 = vmatpush1.bf16.msra.mxu0 %v123
    %145 = vmatprep.subr.bf16.mxu0 0
    %146 = vmatpush1.bf16.msra.mxu0 %v124
    %147 = vmatprep.subr.bf16.mxu0 0
    %148 = vmatpush1.bf16.msra.mxu0 %v125
    %149 = vmatprep.subr.bf16.mxu0 0
    %150 = vmatpush1.bf16.msra.mxu0 %v126
    %151 = vmatprep.subr.bf16.mxu0 0
    %152 = vmatpush1.bf16.msra.mxu0 0
    %153 = vmatprep.subr.bf16.mxu0 0
    %154 = vmatpush1.bf16.msra.mxu0 0
    %155 = vmatprep.subr.bf16.mxu0 0
    %156 = vmatpush1.bf16.msra.mxu0 0
    %157 = vmatprep.subr.bf16.mxu0 0
    %158 = vmatpush1.bf16.msra.mxu0 0
    %159 = vmatprep.subr.bf16.mxu0 0
    %160 = vmatpush1.bf16.msra.mxu0 0
    %161 = vmatprep.subr.bf16.mxu0 0
    %162 = vmatpush1.bf16.msra.mxu0 0
    %163 = vmatprep.subr.bf16.mxu0 0
    %164 = vmatpush1.bf16.msra.mxu0 0
    %165 = vmatprep.subr.bf16.mxu0 0
    %166 = vmatpush1.bf16.msra.mxu0 0
    %167 = vmatprep.mubr.bf16.mxu0 0
    %168 = vmatmul.mubr.bf16.gmra.mrb[0].mxu0 %v65
    %v169 = vpop.f32.mrb[0].mxu0
    %v170 = vadd.f32 %v86, %v169
    %v171 = vpop.f32.mrb[0].mxu0
    %v172 = vpop.f32.mrb[0].mxu0
    %v173 = vadd.f32 %v86, %v172
    %v174 = vpop.f32.mrb[0].mxu0
    %175 = vdwg.mxu0
    %v176 = vadd.f32 %v63, %v170
    %v177 = vadd.f32 %v64, %v173
    %v178 = vpack.c.bf16 %v177, %v176
    %v179 = vld [vmem:[#allocation7] sm:$0xf]
    %v180 = vld [vmem:[#allocation7 + $0x4] sm:$0xf]
    %v181 = vld [vmem:[#allocation7 + $0x8] sm:$0xf]
    %v182 = vld [vmem:[#allocation7 + $0xc] sm:$0xf]
    %v183 = vld [vmem:[#allocation7 + $0x10] sm:$0xf]
    %v184 = vld [vmem:[#allocation7 + $0x14] sm:$0xf]
    %v185 = vld [vmem:[#allocation7 + $0x18] sm:$0xf]
    %v186 = vld [vmem:[#allocation7 + $0x1c] sm:$0xf]
    %v187 = vld [vmem:[#allocation7 + $0x20] sm:$0xf]
    %v188 = vld [vmem:[#allocation7 + $0x24] sm:$0xf]
    %v189 = vld [vmem:[#allocation7 + $0x28] sm:$0xf]
    %v190 = vld [vmem:[#allocation7 + $0x2c] sm:$0xf]
    %v191 = vld [vmem:[#allocation7 + $0x30] sm:$0xf]
    %v192 = vld [vmem:[#allocation7 + $0x34] sm:$0xf]
    %v193 = vld [vmem:[#allocation7 + $0x38] sm:$0xf]
    %v194 = vld [vmem:[#allocation7 + $0x3c] sm:$0xf]
    %v195 = vld [vmem:[%s4] sm:$0x1]
    %v196 = vlaneseq
    %v197 = vshrl.u32 %v196, 7
    %v198 = vsub.s32 0, %v197
    %v199 = vrot.slane %v195, %v198
    %v216 = vunpack.c.l.b16 %v179
    %v217 = vunpack.c.l.b16 %v180
    %v218 = vunpack.c.l.b16 %v181
    %v219 = vunpack.c.l.b16 %v182
    %v220 = vunpack.c.l.b16 %v183
    %v221 = vunpack.c.l.b16 %v184
    %v222 = vunpack.c.l.b16 %v185
    %v223 = vunpack.c.l.b16 %v186
    %v224 = vunpack.c.l.b16 %v187
    %v225 = vunpack.c.l.b16 %v188
    %v226 = vunpack.c.l.b16 %v189
    %v227 = vunpack.c.l.b16 %v190
    %v228 = vunpack.c.l.b16 %v191
    %v229 = vunpack.c.l.b16 %v192
    %v230 = vunpack.c.l.b16 %v193
    %v231 = vunpack.c.l.b16 %v194
    %v232 = vpack.c.b16 %v217, %v216
    %v233 = vpack.c.b16 %v219, %v218
    %v234 = vpack.c.b16 %v221, %v220
    %v235 = vpack.c.b16 %v223, %v222
    %v236 = vpack.c.b16 %v225, %v224
    %v237 = vpack.c.b16 %v227, %v226
    %v238 = vpack.c.b16 %v229, %v228
    %v239 = vpack.c.b16 %v231, %v230
    %248 = vmatprep.subr.bf16.mxu0 0
    %249 = vmatpush1.bf16.msra.mxu0 %v232
    %250 = vmatprep.subr.bf16.mxu0 0
    %251 = vmatpush1.bf16.msra.mxu0 %v233
    %252 = vmatprep.subr.bf16.mxu0 0
    %253 = vmatpush1.bf16.msra.mxu0 %v234
    %254 = vmatprep.subr.bf16.mxu0 0
    %255 = vmatpush1.bf16.msra.mxu0 %v235
    %256 = vmatprep.subr.bf16.mxu0 0
    %257 = vmatpush1.bf16.msra.mxu0 %v236
    %258 = vmatprep.subr.bf16.mxu0 0
    %259 = vmatpush1.bf16.msra.mxu0 %v237
    %260 = vmatprep.subr.bf16.mxu0 0
    %261 = vmatpush1.bf16.msra.mxu0 %v238
    %262 = vmatprep.subr.bf16.mxu0 0
    %263 = vmatpush1.bf16.msra.mxu0 %v239
    %264 = vmatprep.subr.bf16.mxu0 0
    %265 = vmatpush1.bf16.msra.mxu0 0
    %266 = vmatprep.subr.bf16.mxu0 0
    %267 = vmatpush1.bf16.msra.mxu0 0
    %268 = vmatprep.subr.bf16.mxu0 0
    %269 = vmatpush1.bf16.msra.mxu0 0
    %270 = vmatprep.subr.bf16.mxu0 0
    %271 = vmatpush1.bf16.msra.mxu0 0
    %272 = vmatprep.subr.bf16.mxu0 0
    %273 = vmatpush1.bf16.msra.mxu0 0
    %274 = vmatprep.subr.bf16.mxu0 0
    %275 = vmatpush1.bf16.msra.mxu0 0
    %276 = vmatprep.subr.bf16.mxu0 0
    %277 = vmatpush1.bf16.msra.mxu0 0
    %278 = vmatprep.subr.bf16.mxu0 0
    %279 = vmatpush1.bf16.msra.mxu0 0
    %280 = vmatprep.mubr.bf16.mxu0 0
    %281 = vmatmul.mubr.bf16.gmra.mrb[0].mxu0 %v178
    %v282 = vpop.f32.mrb[0].mxu0
    %v283 = vadd.f32 %v199, %v282
    %v284 = vpop.f32.mrb[0].mxu0
    %v285 = vpop.f32.mrb[0].mxu0
    %v286 = vadd.f32 %v199, %v285
    %v287 = vpop.f32.mrb[0].mxu0
    %288 = vdwg.mxu0
    %v289 = vadd.f32 %v176, %v283
    %v290 = vadd.f32 %v177, %v286
    %v291 = vpack.c.bf16 %v290, %v289
    %s292 = scalar_lea.vmem [#allocation5], 64
    %v293 = vld [vmem:[%s292] sm:$0xf]
    %v294 = vld [vmem:[%s292 + $0x4] sm:$0xf]
    %v295 = vld [vmem:[%s292 + $0x8] sm:$0xf]
    %v296 = vld [vmem:[%s292 + $0xc] sm:$0xf]
    %v297 = vld [vmem:[%s292 + $0x10] sm:$0xf]
    %v298 = vld [vmem:[%s292 + $0x14] sm:$0xf]
    %v299 = vld [vmem:[%s292 + $0x18] sm:$0xf]
    %v300 = vld [vmem:[%s292 + $0x1c] sm:$0xf]
    %v301 = vld [vmem:[%s292 + $0x20] sm:$0xf]
    %v302 = vld [vmem:[%s292 + $0x24] sm:$0xf]
    %v303 = vld [vmem:[%s292 + $0x28] sm:$0xf]
    %v304 = vld [vmem:[%s292 + $0x2c] sm:$0xf]
    %v305 = vld [vmem:[%s292 + $0x30] sm:$0xf]
    %v306 = vld [vmem:[%s292 + $0x34] sm:$0xf]
    %v307 = vld [vmem:[%s292 + $0x38] sm:$0xf]
    %v308 = vld [vmem:[%s292 + $0x3c] sm:$0xf]
    %v309 = vld [vmem:[%s2 + $0x1] sm:$0x1]
    %v310 = vlaneseq
    %v311 = vshrl.u32 %v310, 7
    %v312 = vsub.s32 0, %v311
    %v313 = vrot.slane %v309, %v312
    %v330 = vunpack.c.l.b16 %v293
    %v331 = vunpack.c.l.b16 %v294
    %v332 = vunpack.c.l.b16 %v295
    %v333 = vunpack.c.l.b16 %v296
    %v334 = vunpack.c.l.b16 %v297
    %v335 = vunpack.c.l.b16 %v298
    %v336 = vunpack.c.l.b16 %v299
    %v337 = vunpack.c.l.b16 %v300
    %v338 = vunpack.c.l.b16 %v301
    %v339 = vunpack.c.l.b16 %v302
    %v340 = vunpack.c.l.b16 %v303
    %v341 = vunpack.c.l.b16 %v304
    %v342 = vunpack.c.l.b16 %v305
    %v343 = vunpack.c.l.b16 %v306
    %v344 = vunpack.c.l.b16 %v307
    %v345 = vunpack.c.l.b16 %v308
    %v346 = vpack.c.b16 %v331, %v330
    %v347 = vpack.c.b16 %v333, %v332
    %v348 = vpack.c.b16 %v335, %v334
    %v349 = vpack.c.b16 %v337, %v336
    %v350 = vpack.c.b16 %v339, %v338
    %v351 = vpack.c.b16 %v341, %v340
    %v352 = vpack.c.b16 %v343, %v342
    %v353 = vpack.c.b16 %v345, %v344
    %362 = vmatprep.subr.bf16.mxu0 0
    %363 = vmatpush1.bf16.msra.mxu0 %v346
    %364 = vmatprep.subr.bf16.mxu0 0
    %365 = vmatpush1.bf16.msra.mxu0 %v347
    %366 = vmatprep.subr.bf16.mxu0 0
    %367 = vmatpush1.bf16.msra.mxu0 %v348
    %368 = vmatprep.subr.bf16.mxu0 0
    %369 = vmatpush1.bf16.msra.mxu0 %v349
    %370 = vmatprep.subr.bf16.mxu0 0
    %371 = vmatpush1.bf16.msra.mxu0 %v350
    %372 = vmatprep.subr.bf16.mxu0 0
    %373 = vmatpush1.bf16.msra.mxu0 %v351
    %374 = vmatprep.subr.bf16.mxu0 0
    %375 = vmatpush1.bf16.msra.mxu0 %v352
    %376 = vmatprep.subr.bf16.mxu0 0
    %377 = vmatpush1.bf16.msra.mxu0 %v353
    %378 = vmatprep.subr.bf16.mxu0 0
    %379 = vmatpush1.bf16.msra.mxu0 0
    %380 = vmatprep.subr.bf16.mxu0 0
    %381 = vmatpush1.bf16.msra.mxu0 0
    %382 = vmatprep.subr.bf16.mxu0 0
    %383 = vmatpush1.bf16.msra.mxu0 0
    %384 = vmatprep.subr.bf16.mxu0 0
    %385 = vmatpush1.bf16.msra.mxu0 0
    %386 = vmatprep.subr.bf16.mxu0 0
    %387 = vmatpush1.bf16.msra.mxu0 0
    %388 = vmatprep.subr.bf16.mxu0 0
    %389 = vmatpush1.bf16.msra.mxu0 0
    %390 = vmatprep.subr.bf16.mxu0 0
    %391 = vmatpush1.bf16.msra.mxu0 0
    %392 = vmatprep.subr.bf16.mxu0 0
    %393 = vmatpush1.bf16.msra.mxu0 0
    %394 = vmatprep.mubr.bf16.mxu0 0
    %395 = vmatmul.mubr.bf16.gmra.mrb[0].mxu0 %v291
    %v396 = vpop.f32.mrb[0].mxu0
    %v397 = vadd.f32 %v313, %v396
    %v398 = vpop.f32.mrb[0].mxu0
    %v399 = vpop.f32.mrb[0].mxu0
    %v400 = vadd.f32 %v313, %v399
    %v401 = vpop.f32.mrb[0].mxu0
    %402 = vdwg.mxu0
    %v403 = vadd.f32 %v289, %v397
    %v404 = vadd.f32 %v290, %v400
    %v405 = vpack.c.bf16 %v404, %v403
    %s406 = scalar_lea.vmem [#allocation7], 64
    %v407 = vld [vmem:[%s406] sm:$0xf]
    %v408 = vld [vmem:[%s406 + $0x4] sm:$0xf]
    %v409 = vld [vmem:[%s406 + $0x8] sm:$0xf]
    %v410 = vld [vmem:[%s406 + $0xc] sm:$0xf]
    %v411 = vld [vmem:[%s406 + $0x10] sm:$0xf]
    %v412 = vld [vmem:[%s406 + $0x14] sm:$0xf]
    %v413 = vld [vmem:[%s406 + $0x18] sm:$0xf]
    %v414 = vld [vmem:[%s406 + $0x1c] sm:$0xf]
    %v415 = vld [vmem:[%s406 + $0x20] sm:$0xf]
    %v416 = vld [vmem:[%s406 + $0x24] sm:$0xf]
    %v417 = vld [vmem:[%s406 + $0x28] sm:$0xf]
    %v418 = vld [vmem:[%s406 + $0x2c] sm:$0xf]
    %v419 = vld [vmem:[%s406 + $0x30] sm:$0xf]
    %v420 = vld [vmem:[%s406 + $0x34] sm:$0xf]
    %v421 = vld [vmem:[%s406 + $0x38] sm:$0xf]
    %v422 = vld [vmem:[%s406 + $0x3c] sm:$0xf]
    %v423 = vld [vmem:[%s4 + $0x1] sm:$0x1]
    %v424 = vlaneseq
    %v425 = vshrl.u32 %v424, 7
    %v426 = vsub.s32 0, %v425
    %v427 = vrot.slane %v423, %v426
    %v444 = vunpack.c.l.b16 %v407
    %v445 = vunpack.c.l.b16 %v408
    %v446 = vunpack.c.l.b16 %v409
    %v447 = vunpack.c.l.b16 %v410
    %v448 = vunpack.c.l.b16 %v411
    %v449 = vunpack.c.l.b16 %v412
    %v450 = vunpack.c.l.b16 %v413
    %v451 = vunpack.c.l.b16 %v414
    %v452 = vunpack.c.l.b16 %v415
    %v453 = vunpack.c.l.b16 %v416
    %v454 = vunpack.c.l.b16 %v417
    %v455 = vunpack.c.l.b16 %v418
    %v456 = vunpack.c.l.b16 %v419
    %v457 = vunpack.c.l.b16 %v420
    %v458 = vunpack.c.l.b16 %v421
    %v459 = vunpack.c.l.b16 %v422
    %v460 = vpack.c.b16 %v445, %v444
    %v461 = vpack.c.b16 %v447, %v446
    %v462 = vpack.c.b16 %v449, %v448
    %v463 = vpack.c.b16 %v451, %v450
    %v464 = vpack.c.b16 %v453, %v452
    %v465 = vpack.c.b16 %v455, %v454
    %v466 = vpack.c.b16 %v457, %v456
    %v467 = vpack.c.b16 %v459, %v458
    %476 = vmatprep.subr.bf16.mxu0 0
    %477 = vmatpush1.bf16.msra.mxu0 %v460
    %478 = vmatprep.subr.bf16.mxu0 0
    %479 = vmatpush1.bf16.msra.mxu0 %v461
    %480 = vmatprep.subr.bf16.mxu0 0
    %481 = vmatpush1.bf16.msra.mxu0 %v462
    %482 = vmatprep.subr.bf16.mxu0 0
    %483 = vmatpush1.bf16.msra.mxu0 %v463
    %484 = vmatprep.subr.bf16.mxu0 0
    %485 = vmatpush1.bf16.msra.mxu0 %v464
    %486 = vmatprep.subr.bf16.mxu0 0
    %487 = vmatpush1.bf16.msra.mxu0 %v465
    %488 = vmatprep.subr.bf16.mxu0 0
    %489 = vmatpush1.bf16.msra.mxu0 %v466
    %490 = vmatprep.subr.bf16.mxu0 0
    %491 = vmatpush1.bf16.msra.mxu0 %v467
    %492 = vmatprep.subr.bf16.mxu0 0
    %493 = vmatpush1.bf16.msra.mxu0 0
    %494 = vmatprep.subr.bf16.mxu0 0
    %495 = vmatpush1.bf16.msra.mxu0 0
    %496 = vmatprep.subr.bf16.mxu0 0
    %497 = vmatpush1.bf16.msra.mxu0 0
    %498 = vmatprep.subr.bf16.mxu0 0
    %499 = vmatpush1.bf16.msra.mxu0 0
    %500 = vmatprep.subr.bf16.mxu0 0
    %501 = vmatpush1.bf16.msra.mxu0 0
    %502 = vmatprep.subr.bf16.mxu0 0
    %503 = vmatpush1.bf16.msra.mxu0 0
    %504 = vmatprep.subr.bf16.mxu0 0
    %505 = vmatpush1.bf16.msra.mxu0 0
    %506 = vmatprep.subr.bf16.mxu0 0
    %507 = vmatpush1.bf16.msra.mxu0 0
    %508 = vmatprep.mubr.bf16.mxu0 0
    %509 = vmatmul.mubr.bf16.gmra.mrb[0].mxu0 %v405
    %v510 = vpop.f32.mrb[0].mxu0
    %v511 = vadd.f32 %v427, %v510
    %v512 = vpop.f32.mrb[0].mxu0
    %v513 = vpop.f32.mrb[0].mxu0
    %v514 = vadd.f32 %v427, %v513
    %v515 = vpop.f32.mrb[0].mxu0
    %516 = vdwg.mxu0
    %v517 = vadd.f32 %v403, %v511
    %v518 = vadd.f32 %v404, %v514
    %519 = vst [vmem:[#allocation8] sm:$0xff] %v517
    %520 = vst [vmem:[#allocation8 + $0x8] sm:$0xff] %v518
    // Predicated region
    $region34: #{tpu_custom_call.1} parent=1 // pred_check
      _
    $region35: #{tpu_custom_call.1} parent=1 // pred_check_branch
      %522 = sbr.rel (0) target = $region37
    $region36: #{tpu_custom_call.1} parent=1 // pred_region
      %s524 = ssub.s32 256, 256
      %525 = vsyncadd [#allocation4], %s524
      %s526 = sshll.u32 [#allocation8], 4
      %s527 = int_to_ptr.vmem [resolvable:$true] %s526
      %532 = dma.vmem_to_hbm [thread:$0]  %s527, 256, %s5, [#allocation4], 128, 128, 8
    $region37: #{tpu_custom_call.1} parent=1 // pred_fallthru
      _
    // Predicated region
    $region38: #{tpu_custom_call.1} parent=1 // pred_check
      _
    $region39: #{tpu_custom_call.1} parent=1 // pred_check_branch
      %534 = sbr.rel (0) target = $region41
    $region40: #{tpu_custom_call.1} parent=1 // pred_region
      %535 = dma.done [#allocation4], 256
    $region41: #{tpu_custom_call.1} parent=1 // pred_fallthru
      _
    %536 = vsyncpa [#allocation3], 1
    %537 = vsyncpa [#allocation6], 1
    %538 = vsyncpa [#allocation4], 1

</llo_original>
